<compile_context>
chip_gen: v7x
topology: tpu7x:2x2x1
jax: 0.10.0
libtpu: 0.0.40
codegen_flags: <defaults>
</compile_context>

<pallas_src>
import jax
import jax.numpy as jnp
from jax.experimental import pallas as pl
from jax.experimental.pallas import tpu as pltpu


def _combine_kernel(inv_ref, equiv_ref, out_ref):
    c1 = inv_ref.shape[-1]
    c2 = equiv_ref.shape[-1]
    # Static slices of the output ref -> plain vector stores.  The second
    # store is masked only when c1 % 128 != 0 (see TODO in header); that
    # vst.msk sits on a non-binding slot for this HBM-bound streaming copy.
    out_ref[:, 0:c1] = inv_ref[...]
    out_ref[:, c1:c1 + c2] = equiv_ref[...]


def _pad128(c: int) -> int:
    return ((c + 127) // 128) * 128


def _vmem_capacity_bytes() -> int:
    """Physical VMEM per TensorCore; falls back to the v7x-safe 64 MiB."""
    try:
        cap = int(pltpu.get_tpu_info().vmem_capacity_bytes)
        if cap > 0:
            return cap
    except Exception:  # noqa: BLE001 - info query is best-effort only
        pass
    return 64 * 1024 * 1024


def combine_block(inv_node_features: jax.Array,
                  equiv_node_features: jax.Array,
                  *,
                  row_tile: int | None = None,
                  force_pallas: bool = False) -> jax.Array:
    """Pallas equivalent of CombineBlock.forward (concat along dim=1)."""
    assert inv_node_features.shape[0] == equiv_node_features.shape[0]
    assert inv_node_features.dtype == equiv_node_features.dtype

    n, c1 = inv_node_features.shape
    _, c2 = equiv_node_features.shape
    c_out = c1 + c2
    dtype = inv_node_features.dtype
    itemsize = jnp.dtype(dtype).itemsize

    # Fast path: for small inputs (all realistic MACE node counts) the copy is
    # KiB-scale and pallas_call launch overhead dominates -> let XLA fuse it.
    if not force_pallas and n * c_out * itemsize < (1 << 20):
        return jnp.concatenate([inv_node_features, equiv_node_features], axis=1)

    # Sublane granularity for the second-to-last block dim per dtype packing.
    sublane = {4: 8, 2: 16, 1: 32}.get(itemsize, 8)

    vmem_cap = _vmem_capacity_bytes()
    # Pipelined (double-buffered) footprint budget: 3/8 of physical VMEM
    # -> ~24 MiB on v7x, ~48 MiB on v5e/v6e.
    budget_total = (3 * vmem_cap) // 8
    # Per-row pipelined bytes, accounting for lane padding of both input
    # slabs and the output slab, times 2 for double buffering.
    bytes_per_row = 2 * (_pad128(c1) + _pad128(c2) + _pad128(c_out)) * itemsize

    if row_tile is None:
        row_tile = budget_total // max(1, bytes_per_row)
        row_tile = max(sublane, min(row_tile, 32768))

    if row_tile >= n:
        if n > sublane:
            # Keep >= 2 grid steps so both of v7x's TensorCores stream half of
            # the rows; harmless single extra step on single-TC v5e/v6e.
            half = (((n + 1) // 2) + sublane - 1) // sublane * sublane
            row_tile = half if half < n else n
        else:
            row_tile = n
    else:
        # Interior blocks must respect the sublane granularity.
        row_tile = max(sublane, (row_tile // sublane) * sublane)

    grid = (pl.cdiv(n, row_tile),)
    out_shape = jax.ShapeDtypeStruct((n, c_out), dtype)

    # Raise the scoped VMEM limit only as much as the chosen tiling needs,
    # staying well inside physical VMEM (v7x: 64 MiB/TC).
    vmem_limit = min(int(vmem_cap * 3) // 4,
                     max(32 * 1024 * 1024, budget_total + 8 * 1024 * 1024))

    cost = pl.CostEstimate(flops=0, transcendentals=0,
                           bytes_accessed=2 * n * c_out * itemsize)

    return pl.pallas_call(
        _combine_kernel,
        out_shape=out_shape,
        grid=grid,
        in_specs=[
            pl.BlockSpec((row_tile, c1), lambda i: (i, 0)),
            pl.BlockSpec((row_tile, c2), lambda i: (i, 0)),
        ],
        out_specs=pl.BlockSpec((row_tile, c_out), lambda i: (i, 0)),
        compiler_params=pltpu.CompilerParams(
            dimension_semantics=("parallel",),
            vmem_limit_bytes=vmem_limit),
        cost_estimate=cost,
    )(inv_node_features, equiv_node_features)


if __name__ == "__main__":
    key = jax.random.PRNGKey(0)
    k_inv, k_equiv, k_inv2, k_equiv2 = jax.random.split(key, 4)

    # MACE-like shapes: 16 nodes, 32 invariant + 96 equivariant channels
    # -> concatenated feature dim 128.
    num_nodes = 16
    c_inv, c_equiv = 32, 96
    inv = jax.random.normal(k_inv, (num_nodes, c_inv), jnp.float32)
    equiv = jax.random.normal(k_equiv, (num_nodes, c_equiv), jnp.float32)
    ref = jnp.concatenate([inv, equiv], axis=1)

    # 1) Pallas path (forced): exercises the >=2-step parallel grid.
    out = jax.block_until_ready(combine_block(inv, equiv, force_pallas=True))
    assert out.shape == (num_nodes, c_inv + c_equiv)
    assert out.dtype == jnp.float32
    assert bool(jnp.array_equal(out, ref))

    # 2) Pallas path with an explicit tile and a ragged last block
    #    (200 rows, 64-row tiles -> grid of 4, last block partially filled).
    n2 = 200
    inv2 = jax.random.normal(k_inv2, (n2, c_inv), jnp.float32)
    equiv2 = jax.random.normal(k_equiv2, (n2, c_equiv), jnp.float32)
    out2 = jax.block_until_ready(
        combine_block(inv2, equiv2, row_tile=64, force_pallas=True))
    ref2 = jnp.concatenate([inv2, equiv2], axis=1)
    assert out2.shape == (n2, c_inv + c_equiv)
    assert bool(jnp.array_equal(out2, ref2))

    # 3) Default dispatch: small inputs take the fused jnp.concatenate path.
    out3 = jax.block_until_ready(combine_block(inv, equiv))
    assert bool(jnp.array_equal(out3, ref))

    print("KERNEL_OK")
</pallas_src>

<mosaic_0001>
module attributes {stable_mosaic.version = 11 : i64} {
  func.func @_combine_kernel(%arg0: i32, %arg1: memref<8x32xf32, #tpu.memory_space<vmem>>, %arg2: memref<8x96xf32, #tpu.memory_space<vmem>>, %arg3: memref<8x128xf32, #tpu.memory_space<vmem>>) attributes {dimension_semantics = [#tpu.dimension_semantics<parallel>], iteration_bounds = array<i64: 2>, scalar_prefetch = 0 : i64, scratch_operands = 0 : i64, tpu.core_type = #tpu.core_type<tc>, window_params = [{transform_indices = @transform_0, window_bounds = array<i64: 8, 32>}, {transform_indices = @transform_1, window_bounds = array<i64: 8, 96>}, {transform_indices = @transform_2, window_bounds = array<i64: 8, 128>}]} {
    %c0 = arith.constant 0 : index
    %c0_0 = arith.constant 0 : index
    %0 = vector.load %arg1[%c0, %c0_0] : memref<8x32xf32, #tpu.memory_space<vmem>>, vector<8x32xf32>
    %c0_1 = arith.constant 0 : index
    %c0_2 = arith.constant 0 : index
    %1 = vector.load %arg3[%c0_1, %c0_2] : memref<8x128xf32, #tpu.memory_space<vmem>>, vector<8x32xf32>
    tpu.vector_store %arg3[%c0_1, %c0_2], %0 {strides = array<i32>} : memref<8x128xf32, #tpu.memory_space<vmem>>, vector<8x32xf32>,
    %c0_3 = arith.constant 0 : index
    %c0_4 = arith.constant 0 : index
    %2 = vector.load %arg2[%c0_3, %c0_4] : memref<8x96xf32, #tpu.memory_space<vmem>>, vector<8x96xf32>
    %c0_5 = arith.constant 0 : index
    %c32 = arith.constant 32 : index
    %3 = vector.load %arg3[%c0_5, %c32] : memref<8x128xf32, #tpu.memory_space<vmem>>, vector<8x96xf32>
    tpu.vector_store %arg3[%c0_5, %c32], %2 {strides = array<i32>} : memref<8x128xf32, #tpu.memory_space<vmem>>, vector<8x96xf32>,
    return
  }
  func.func @transform_0(%arg0: i32) -> (i32, i32) {
    %c0_i32 = arith.constant 0 : i32
    %c0_i32_0 = arith.constant 0 : i32
    return %arg0, %c0_i32 : i32, i32
  }
  func.func @transform_1(%arg0: i32) -> (i32, i32) {
    %c0_i32 = arith.constant 0 : i32
    %c0_i32_0 = arith.constant 0 : i32
    return %arg0, %c0_i32 : i32, i32
  }
  func.func @transform_2(%arg0: i32) -> (i32, i32) {
    %c0_i32 = arith.constant 0 : i32
    %c0_i32_0 = arith.constant 0 : i32
    return %arg0, %c0_i32 : i32, i32
  }
}

</mosaic_0001>

<llo_original>
// kernel: tpu_custom_call.1
$region0: #{tpu_custom_call.1}
  #allocation0 [shape = 'u32[]', space=smem, size = 0x4, offset = 0x4, fixed_abs, tag = 'smem constant byte address 0x4 - core index']
  #allocation1 [shape = 'u32[144,128]{1,0:T(1,128)}', space=vmem, size = 0x12000, scoped, tag = 'internal scratch']
  %s0 = inlined_call_operand.hbm [shape: f32[16,32], index: 0, kind: input, shape index: {}]
  %s1 = inlined_call_operand.hbm [shape: f32[16,96], index: 1, kind: input, shape index: {}]
  %s2 = inlined_call_operand.hbm [shape: f32[16,128], index: 2, kind: output, shape index: {}]
  %s3 = sld [smem:[#allocation0]]
  $region49: #{tpu_custom_call.1} parent=0
    _
  %s5 = ssub.s32 1, %s3
  %s6 = scalar_select 0, %s5, %s3
  $region1: #{tpu_custom_call.1} parent=0
    #allocation2 [shape = 'u8[8192]{0}', space=vmem, size = 0x2000, scoped, tag = 'input window, operand 0']
    #allocation3 [shape = 's32[2]{0}', space=sflag, size = 0x8, scoped, tag = 'scoped memory for tpu_custom_call.1']
    #allocation4 [shape = 's32[2]{0}', space=sflag, size = 0x8, scoped, tag = 'scoped memory for tpu_custom_call.1']
    #allocation5 [shape = 'u8[8192]{0}', space=vmem, size = 0x2000, scoped, tag = 'input window, operand 1']
    #allocation6 [shape = 's32[2]{0}', space=sflag, size = 0x8, scoped, tag = 'scoped memory for tpu_custom_call.1']
    #allocation7 [shape = 'u8[8192]{0}', space=vmem, size = 0x2000, scoped, tag = 'output window, operand 0']
    %7 = vsyncpa [#allocation3], 0
    %s8 = scalar_lea.sflag [#allocation3], 1
    %9 = vsyncpa %s8, 0
    %10 = vsyncpa [#allocation6], 0
    %s11 = scalar_lea.sflag [#allocation6], 1
    %12 = vsyncpa %s11, 0
    %13 = vsyncpa [#allocation4], 0
    %s14 = scalar_lea.sflag [#allocation4], 1
    %15 = vsyncpa %s14, 0
    loop: start=0, step=1, limit=4
    $region2: #{tpu_custom_call.1} parent=1 // loop_pre_header
      _
    $region3: #{tpu_custom_call.1} parent=1 // loop_header
      %s17 = sphi 0, %s21
      %p18 = scmp.ge.s32.totalorder %s17, 4
      %s27 = sphi 0, %s29
      %s30 = sphi 0, %s27
      %s31 = sphi 0, %s30
      %s47 = sphi 0, %s31
      %s53 = sphi 0, %s55
      %s56 = sphi 0, %s53
      %s57 = sphi 0, %s56
      %s73 = sphi 0, %s57
      %s79 = sphi 0, %s81
      %s82 = sphi 0, %s79
      %s83 = sphi 0, %s82
      %s99 = sphi 0, %s83
    $region4: #{tpu_custom_call.1} parent=1 // loop_header_branch
      %20 = sbr.rel (%p18) target = $region8
    $region5: #{tpu_custom_call.1} parent=1 // loop_body
      %s22 = ssub.s32 %s17, 1
      %s23 = ssub.s32 %s17, 2
      %s24 = sadd.s32 %s17, 1
      %s25 = ssub.s32 %s17, %s24
      %p26 = scmp.eq.s32.totalorder %s25, 0
      %s28 = sadd.s32 %s27, 1
      %s29 = scalar_select %p26, %s27, %s28
      %p32 = pneg %p26
      %p33 = scmp.eq.s32.totalorder %s17, 1
      %p34 = por %p32, %p33
      %p35 = scmp.ne.s32.totalorder %s27, %s30
      %p36 = scmp.eq.s32.totalorder %s17, 0
      %p37 = por %p35, %p36
      %p38 = scmp.ne.s32.totalorder %s27, %s30
      %p39 = scmp.eq.s32.totalorder %s22, 1
      %p40 = por %p38, %p39
      %p41 = scmp.ne.s32.totalorder %s30, %s31
      %p42 = scmp.eq.s32.totalorder %s22, 0
      %p43 = por %p41, %p42
      %p44 = scmp.ne.s32.totalorder %s30, %s31
      %p45 = scmp.eq.s32.totalorder %s23, 1
      %p46 = por %p44, %p45
      %p48 = scmp.ne.s32.totalorder %s31, %s47
      %p49 = scmp.eq.s32.totalorder %s23, 0
      %p50 = por %p48, %p49
      %s51 = ssub.s32 %s17, %s24
      %p52 = scmp.eq.s32.totalorder %s51, 0
      %s54 = sadd.s32 %s53, 1
      %s55 = scalar_select %p52, %s53, %s54
      %p58 = pneg %p52
      %p59 = scmp.eq.s32.totalorder %s17, 1
      %p60 = por %p58, %p59
      %p61 = scmp.ne.s32.totalorder %s53, %s56
      %p62 = scmp.eq.s32.totalorder %s17, 0
      %p63 = por %p61, %p62
      %p64 = scmp.ne.s32.totalorder %s53, %s56
      %p65 = scmp.eq.s32.totalorder %s22, 1
      %p66 = por %p64, %p65
      %p67 = scmp.ne.s32.totalorder %s56, %s57
      %p68 = scmp.eq.s32.totalorder %s22, 0
      %p69 = por %p67, %p68
      %p70 = scmp.ne.s32.totalorder %s56, %s57
      %p71 = scmp.eq.s32.totalorder %s23, 1
      %p72 = por %p70, %p71
      %p74 = scmp.ne.s32.totalorder %s57, %s73
      %p75 = scmp.eq.s32.totalorder %s23, 0
      %p76 = por %p74, %p75
      %s77 = ssub.s32 %s17, %s24
      %p78 = scmp.eq.s32.totalorder %s77, 0
      %s80 = sadd.s32 %s79, 1
      %s81 = scalar_select %p78, %s79, %s80
      %p84 = pneg %p78
      %p85 = scmp.eq.s32.totalorder %s17, 1
      %p86 = por %p84, %p85
      %p87 = scmp.ne.s32.totalorder %s79, %s82
      %p88 = scmp.eq.s32.totalorder %s17, 0
      %p89 = por %p87, %p88
      %p90 = scmp.ne.s32.totalorder %s79, %s82
      %p91 = scmp.eq.s32.totalorder %s22, 1
      %p92 = por %p90, %p91
      %p93 = scmp.ne.s32.totalorder %s82, %s83
      %p94 = scmp.eq.s32.totalorder %s22, 0
      %p95 = por %p93, %p94
      %p96 = scmp.ne.s32.totalorder %s82, %s83
      %p97 = scmp.eq.s32.totalorder %s23, 1
      %p98 = por %p96, %p97
      %p100 = scmp.ne.s32.totalorder %s83, %s99
      %p101 = scmp.eq.s32.totalorder %s23, 0
      %p102 = por %p100, %p101
      %p103 = scmp.le.s32.totalorder 1, %s17
      %p104 = scmp.lt.s32.totalorder %s17, 3
      %p105 = pnand %p103, %p104
      %p106 = pneg %p105
      // Predicated region
      $region9: #{tpu_custom_call.1} parent=5 // pred_check
        _
      $region10: #{tpu_custom_call.1} parent=5 // pred_check_branch
        %108 = sbr.rel (%p105) target = $region12
      $region11: #{tpu_custom_call.1} parent=5 // pred_region
        %s109 = ssub.s32 %s17, 1
      $region12: #{tpu_custom_call.1} parent=5 // pred_fallthru
        _
      %p110 = scmp.lt.s32.totalorder %s17, 2
      // Predicated region
      $region13: #{tpu_custom_call.1} parent=5 // pred_check
        %p111 = pneg %p110
      $region14: #{tpu_custom_call.1} parent=5 // pred_check_branch
        %113 = sbr.rel (%p111) target = $region16
      $region15: #{tpu_custom_call.1} parent=5 // pred_region
        // Predicated region
        $region17: #{tpu_custom_call.1} parent=15 // pred_check
          %p114 = pneg %p37
        $region18: #{tpu_custom_call.1} parent=15 // pred_check_branch
          %116 = sbr.rel (%p114) target = $region20
        $region19: #{tpu_custom_call.1} parent=15 // pred_region
          %s117 = sand.u32 %s27, 1
          %s118 = scalar_lea.sflag [#allocation3], %s117
          %s119 = sand.u32 %s27, 1
          %s120 = smul.addr %s119, 8
          %s121 = scalar_lea.vmem [#allocation2], %s120
          %s123 = ssub.s32 128, 128
          %124 = vsyncadd %s118, %s123
          %s125 = smul.addr %s17, 128
          %s126 = scalar_lea.hbm %s0, %s125
          %s128 = sshll.u32 %s121, 4
          %s129 = int_to_ptr.vmem [resolvable:$true] %s128
          %131 = dma.hbm_to_vmem [thread:$0]  %s126, 128, %s129, %s118
        $region20: #{tpu_custom_call.1} parent=15 // pred_fallthru
          _
        // Predicated region
        $region21: #{tpu_custom_call.1} parent=15 // pred_check
          %p132 = pneg %p63
        $region22: #{tpu_custom_call.1} parent=15 // pred_check_branch
          %134 = sbr.rel (%p132) target = $region24
        $region23: #{tpu_custom_call.1} parent=15 // pred_region
          %s135 = sand.u32 %s53, 1
          %s136 = scalar_lea.sflag [#allocation6], %s135
          %s137 = sand.u32 %s53, 1
          %s138 = smul.addr %s137, 8
          %s139 = scalar_lea.vmem [#allocation5], %s138
          %s141 = ssub.s32 128, 128
          %142 = vsyncadd %s136, %s141
          %s143 = smul.addr %s17, 128
          %s144 = scalar_lea.hbm %s1, %s143
          %s146 = sshll.u32 %s139, 4
          %s147 = int_to_ptr.vmem [resolvable:$true] %s146
          %149 = dma.hbm_to_vmem [thread:$0]  %s144, 128, %s147, %s136
        $region24: #{tpu_custom_call.1} parent=15 // pred_fallthru
          _
      $region16: #{tpu_custom_call.1} parent=5 // pred_fallthru
        _
      %p150 = scmp.le.s32.totalorder 1, %s17
      %p151 = scmp.lt.s32.totalorder %s17, 3
      %p152 = pnand %p150, %p151
      %p153 = pneg %p152
      // Predicated region
      $region25: #{tpu_custom_call.1} parent=5 // pred_check
        _
      $region26: #{tpu_custom_call.1} parent=5 // pred_check_branch
        %155 = sbr.rel (%p152) target = $region28
      $region27: #{tpu_custom_call.1} parent=5 // pred_region
        %s156 = ssub.s32 %s17, 1
        %s157 = sand.u32 %s30, 1
        %s158 = scalar_lea.sflag [#allocation3], %s157
        %s159 = sand.u32 %s30, 1
        %s160 = smul.addr %s159, 8
        %s161 = scalar_lea.vmem [#allocation2], %s160
        // Predicated region
        $region29: #{tpu_custom_call.1} parent=27 // pred_check
          %p162 = pneg %p43
        $region30: #{tpu_custom_call.1} parent=27 // pred_check_branch
          %164 = sbr.rel (%p162) target = $region32
        $region31: #{tpu_custom_call.1} parent=27 // pred_region
          %165 = dma.done %s158, 128
        $region32: #{tpu_custom_call.1} parent=27 // pred_fallthru
          _
        %s166 = sand.u32 %s56, 1
        %s167 = scalar_lea.sflag [#allocation6], %s166
        %s168 = sand.u32 %s56, 1
        %s169 = smul.addr %s168, 8
        %s170 = scalar_lea.vmem [#allocation5], %s169
        // Predicated region
        $region33: #{tpu_custom_call.1} parent=27 // pred_check
          %p171 = pneg %p69
        $region34: #{tpu_custom_call.1} parent=27 // pred_check_branch
          %173 = sbr.rel (%p171) target = $region36
        $region35: #{tpu_custom_call.1} parent=27 // pred_region
          %174 = dma.done %s167, 128
        $region36: #{tpu_custom_call.1} parent=27 // pred_fallthru
          _
        %s175 = sand.u32 %s30, 1
        %s176 = scalar_lea.sflag [#allocation3], %s175
        %s177 = sand.u32 %s30, 1
        %s178 = smul.addr %s177, 8
        %s179 = scalar_lea.vmem [#allocation2], %s178
        %p180 = pneg %p43
        %p181 = pneg %p40
        %s182 = sand.u32 %s56, 1
        %s183 = scalar_lea.sflag [#allocation6], %s182
        %s184 = sand.u32 %s56, 1
        %s185 = smul.addr %s184, 8
        %s186 = scalar_lea.vmem [#allocation5], %s185
        %p187 = pneg %p69
        %p188 = pneg %p66
        %p189 = pneg %p95
        %p190 = pneg %p92
        %s191 = sand.u32 %s82, 1
        %s192 = scalar_lea.sflag [#allocation4], %s191
        %s193 = sand.u32 %s82, 1
        %s194 = smul.addr %s193, 8
        %s195 = scalar_lea.vmem [#allocation7], %s194
        %v196 = vld [vmem:[%s161] sm:$0xff]
        %vm197 = vcmask 261120
        %198 = vst.msk [vmem:[%s195] sm:$0xff] %vm197, %v196
        %v199 = vld [vmem:[%s170] sm:$0xff]
        %201 = vrot.lane.b32.xlu0 %v199, 32
        %v202 = vpop.permute.xlu0 %201
        %vm204 = vcmask 1047808
        %205 = vst.msk [vmem:[%s195] sm:$0xff] %vm204, %v202
        %s206 = sand.u32 %s82, 1
        %s207 = scalar_lea.sflag [#allocation4], %s206
        %s208 = sand.u32 %s82, 1
        %s209 = smul.addr %s208, 8
        %s210 = scalar_lea.vmem [#allocation7], %s209
        // Predicated region
        $region37: #{tpu_custom_call.1} parent=27 // pred_check
          %p211 = pneg %p92
        $region38: #{tpu_custom_call.1} parent=27 // pred_check_branch
          %213 = sbr.rel (%p211) target = $region40
        $region39: #{tpu_custom_call.1} parent=27 // pred_region
          %s215 = ssub.s32 128, 128
          %216 = vsyncadd %s207, %s215
          %s217 = smul.addr %s22, 128
          %s218 = scalar_lea.hbm %s2, %s217
          %s220 = sshll.u32 %s210, 4
          %s221 = int_to_ptr.vmem [resolvable:$true] %s220
          %223 = dma.vmem_to_hbm [thread:$0]  %s221, 128, %s218, %s207
        $region40: #{tpu_custom_call.1} parent=27 // pred_fallthru
          _
      $region28: #{tpu_custom_call.1} parent=5 // pred_fallthru
        _
      %p224 = scmp.le.s32.totalorder 2, %s17
      // Predicated region
      $region41: #{tpu_custom_call.1} parent=5 // pred_check
        %p225 = pneg %p224
      $region42: #{tpu_custom_call.1} parent=5 // pred_check_branch
        %227 = sbr.rel (%p225) target = $region44
      $region43: #{tpu_custom_call.1} parent=5 // pred_region
        %s228 = ssub.s32 %s17, 2
        // Predicated region
        $region45: #{tpu_custom_call.1} parent=43 // pred_check
          %p229 = pneg %p98
        $region46: #{tpu_custom_call.1} parent=43 // pred_check_branch
          %231 = sbr.rel (%p229) target = $region48
        $region47: #{tpu_custom_call.1} parent=43 // pred_region
          %s232 = sand.u32 %s83, 1
          %s233 = scalar_lea.sflag [#allocation4], %s232
          %s234 = sand.u32 %s83, 1
          %s235 = smul.addr %s234, 8
          %s236 = scalar_lea.vmem [#allocation7], %s235
          %237 = dma.done %s233, 128
        $region48: #{tpu_custom_call.1} parent=43 // pred_fallthru
          _
      $region44: #{tpu_custom_call.1} parent=5 // pred_fallthru
        _
    $region6: #{tpu_custom_call.1} parent=1 // loop_footer
      %s21 = sadd.s32 1, %s17
    $region7: #{tpu_custom_call.1} parent=1 // loop_footer_branch
      %16 = sbr.rel target = $region3
    $region8: #{tpu_custom_call.1} parent=1 // loop_exit
      _
    %238 = vsyncpa [#allocation3], 1
    %s239 = scalar_lea.sflag [#allocation3], 1
    %240 = vsyncpa %s239, 1
    %241 = vsyncpa [#allocation6], 1
    %s242 = scalar_lea.sflag [#allocation6], 1
    %243 = vsyncpa %s242, 1
    %244 = vsyncpa [#allocation4], 1
    %s245 = scalar_lea.sflag [#allocation4], 1
    %246 = vsyncpa %s245, 1

</llo_original>
